<compile_context>
chip_gen: v7x
topology: tpu7x:2x2x1
jax: 0.10.0
libtpu: 0.0.40
codegen_flags: <defaults>
</compile_context>

<pallas_src>
import math
import functools

import jax
import jax.numpy as jnp
from jax.experimental import pallas as pl
from jax.experimental.pallas import tpu as pltpu


def _cdiv(a, b):
    return -(-a // b)


def _round_up(x, m):
    return ((x + m - 1) // m) * m


def _sublane_multiple(dtype):
    # 8 rows per vreg for 4-byte dtypes, 16 for 2-byte, 32 for 1-byte.
    itemsize = jnp.dtype(dtype).itemsize
    return max(8, 32 // max(1, itemsize))


def _choose_time_tile(t_out, in_rows_per_out_row, feat, dtype):
    """Pick the output-tile row count TT (multiple of the sublane packing)."""
    itemsize = jnp.dtype(dtype).itemsize
    sub = _sublane_multiple(dtype)
    # Double-buffered input tile + double-buffered output tile, per output row.
    bytes_per_out_row = 2 * (in_rows_per_out_row + 1) * feat * itemsize
    budget = 8 * 1024 * 1024  # stays well under default scoped-VMEM on v5e/v6e/v7x
    tt = min(1024, max(sub, budget // max(1, bytes_per_out_row)))
    tt = max(sub, (tt // sub) * sub)
    # No point tiling finer than the whole (sublane-rounded) output.
    tt = min(tt, _round_up(t_out, sub))
    return max(sub, tt)


# ---------------------------------------------------------------------------
# Kernels
# ---------------------------------------------------------------------------

def _drop_general_kernel(x_ref, y_ref, *, tt, factor):
    """General path.  One grid step = (batch element b, output time-tile j).

    x_ref : VMEM [tt * factor, F]  input frames covering this output tile
    y_ref : VMEM [tt, F]           every `factor`-th frame of x_ref
    """
    # Single vectorized strided copy (rows 0, factor, 2*factor, ... of the input tile).
    y_ref[...] = x_ref[pl.ds(0, tt, stride=factor), :]


def _copy_kernel(x_ref, y_ref):
    """Fast path.  The strided selection already happened in the input DMA."""
    y_ref[...] = x_ref[...]


# ---------------------------------------------------------------------------
# Path builders
# ---------------------------------------------------------------------------

def _drop_general(xs, factor, time_tile):
    B, T, F = xs.shape
    T_out = _cdiv(T, factor)
    sub = _sublane_multiple(xs.dtype)
    if time_tile is None:
        TT = _choose_time_tile(T_out, factor, F, xs.dtype)
    else:
        TT = max(sub, _round_up(int(time_tile), sub))
    grid_t = _cdiv(T_out, TT)
    itemsize = jnp.dtype(xs.dtype).itemsize

    kernel = functools.partial(_drop_general_kernel, tt=TT, factor=factor)
    return pl.pallas_call(
        kernel,
        out_shape=jax.ShapeDtypeStruct((B, T_out, F), xs.dtype),
        grid=(B, grid_t),
        in_specs=[
            # Input tile = the TT*factor frames feeding output time-tile j of batch b.
            # (Batch dim squeezed; boundary tiles past T are padded and never land in
            #  valid output rows.)
            pl.BlockSpec((None, TT * factor, F), lambda b, j: (b, j, 0)),
        ],
        out_specs=pl.BlockSpec((None, TT, F), lambda b, j: (b, j, 0)),
        compiler_params=pltpu.CompilerParams(
            dimension_semantics=("parallel", "parallel"),
        ),
        cost_estimate=pl.CostEstimate(
            flops=0,
            transcendentals=0,
            bytes_accessed=B * (T + T_out) * F * itemsize,
        ),
    )(xs)


def _drop_strided_read(xs, factor, time_tile):
    """Fast path: only DMA the kept frames.  Requires T % factor == 0 and F % 128 == 0."""
    B, T, F = xs.shape
    T_out = T // factor
    # Free (row-major) reinterpretation: frame t' = columns [0:F] of row t'.
    x_view = xs.reshape(B, T_out, factor * F)

    sub = _sublane_multiple(xs.dtype)
    if time_tile is None:
        TT = _choose_time_tile(T_out, 1, F, xs.dtype)
    else:
        TT = max(sub, _round_up(int(time_tile), sub))
    grid_t = _cdiv(T_out, TT)
    itemsize = jnp.dtype(xs.dtype).itemsize

    return pl.pallas_call(
        _copy_kernel,
        out_shape=jax.ShapeDtypeStruct((B, T_out, F), xs.dtype),
        grid=(B, grid_t),
        in_specs=[
            # Lane-aligned (F % 128 == 0) first-F-column block of each reshaped row:
            # the generated strided DMA reads exactly the kept frames (factor x less HBM
            # read traffic than the general path).
            pl.BlockSpec((None, TT, F), lambda b, j: (b, j, 0)),
        ],
        out_specs=pl.BlockSpec((None, TT, F), lambda b, j: (b, j, 0)),
        compiler_params=pltpu.CompilerParams(
            dimension_semantics=("parallel", "parallel"),
        ),
        cost_estimate=pl.CostEstimate(
            flops=0,
            transcendentals=0,
            bytes_accessed=2 * B * T_out * F * itemsize,
        ),
    )(x_view)


# ---------------------------------------------------------------------------
# Public wrapper (== DropSubsampler.forward)
# ---------------------------------------------------------------------------

def drop_subsample(xs, xlens, factor, batch_first=True, time_tile=None,
                   use_strided_read=None):
    """JAX/Pallas equivalent of DropSubsampler.forward(xs, xlens, batch_first)."""
    if factor == 1:
        return xs, xlens.astype(jnp.int32)

    if not batch_first:
        # [T, B, F] path: reuse the batch-first kernel on a transposed view.
        # TODO(synk): native [T, B, F] kernel (avoids the two transposes) not implemented.
        ys, ylens = drop_subsample(
            jnp.swapaxes(xs, 0, 1), xlens, factor,
            batch_first=True, time_tile=time_tile, use_strided_read=use_strided_read,
        )
        return jnp.swapaxes(ys, 0, 1), ylens

    B, T, F = xs.shape
    fast_ok = (T % factor == 0) and (F % 128 == 0)
    if use_strided_read is None:
        use_strided_read = fast_ok
    if use_strided_read and not fast_ok:
        raise ValueError("strided-read fast path needs T % factor == 0 and F % 128 == 0")

    if use_strided_read:
        y = _drop_strided_read(xs, factor, time_tile)
    else:
        y = _drop_general(xs, factor, time_tile)

    # New lengths: max(1, ceil(len / factor)) — trivial [B] op, plain JAX in the wrapper.
    xlens_i32 = xlens.astype(jnp.int32)
    ylens = jnp.maximum(jnp.int32(1), (xlens_i32 + (factor - 1)) // factor).astype(jnp.int32)
    return y, ylens


# ---------------------------------------------------------------------------
# Reference + tests
# ---------------------------------------------------------------------------

def _reference(xs, xlens, factor, batch_first=True):
    if factor == 1:
        ref_ys = xs
    elif batch_first:
        ref_ys = xs[:, ::factor]
    else:
        ref_ys = xs[::factor]
    ref_ylens = jnp.array(
        [max(1, math.ceil(int(l) / factor)) for l in xlens], dtype=jnp.int32
    )
    return ref_ys, ref_ylens


def _check(ys, ylens, ref_ys, ref_ylens):
    assert ys.shape == ref_ys.shape and ys.dtype == ref_ys.dtype
    assert jnp.array_equal(ys, ref_ys)
    assert jnp.array_equal(ylens, ref_ylens)


if __name__ == "__main__":
    key = jax.random.PRNGKey(0)

    # Test 1: general path, small shapes: [B, T, F], single time tile, T % factor != 0.
    B, T, F = 2, 16, 32
    factor = 3
    xs = jax.random.normal(key, (B, T, F), dtype=jnp.float32)
    xlens = jnp.array([16, 11], dtype=jnp.int32)
    ys, ylens = drop_subsample(xs, xlens, factor)
    ys = jax.block_until_ready(ys); ylens = jax.block_until_ready(ylens)
    _check(ys, ylens, *_reference(xs, xlens, factor))

    # Test 2: general path with a tiled time axis (grid_t > 1) and partial last tile.
    xs2 = jax.random.normal(jax.random.PRNGKey(1), (2, 50, 32), dtype=jnp.float32)
    xlens2 = jnp.array([50, 23], dtype=jnp.int32)
    ys2, ylens2 = drop_subsample(xs2, xlens2, 3, time_tile=8)
    ys2 = jax.block_until_ready(ys2); ylens2 = jax.block_until_ready(ylens2)
    _check(ys2, ylens2, *_reference(xs2, xlens2, 3))

    # Test 3: strided-read fast path (T % factor == 0, F % 128 == 0), multiple time tiles.
    xs3 = jax.random.normal(jax.random.PRNGKey(2), (2, 96, 128), dtype=jnp.float32)
    xlens3 = jnp.array([96, 40], dtype=jnp.int32)
    ys3, ylens3 = drop_subsample(xs3, xlens3, 3, time_tile=8)
    ys3 = jax.block_until_ready(ys3); ylens3 = jax.block_until_ready(ylens3)
    _check(ys3, ylens3, *_reference(xs3, xlens3, 3))

    # Test 4: batch_first=False ([T, B, F]) and a different factor.
    xs4 = jax.random.normal(jax.random.PRNGKey(3), (16, 2, 32), dtype=jnp.float32)
    xlens4 = jnp.array([16, 9], dtype=jnp.int32)
    ys4, ylens4 = drop_subsample(xs4, xlens4, 2, batch_first=False)
    ys4 = jax.block_until_ready(ys4); ylens4 = jax.block_until_ready(ylens4)
    _check(ys4, ylens4, *_reference(xs4, xlens4, 2, batch_first=False))

    # Test 5: factor == 1 identity path.
    ys5, ylens5 = drop_subsample(xs, xlens, 1)
    ys5 = jax.block_until_ready(ys5); ylens5 = jax.block_until_ready(ylens5)
    _check(ys5, ylens5, *_reference(xs, xlens, 1))

    print("KERNEL_OK")
</pallas_src>

<mosaic_0001>
module attributes {stable_mosaic.version = 11 : i64} {
  func.func @_drop_general_kernel(%arg0: i32, %arg1: i32, %arg2: memref<1x24x32xf32, #tpu.memory_space<vmem>>, %arg3: memref<1x8x32xf32, #tpu.memory_space<vmem>>) attributes {dimension_semantics = [#tpu.dimension_semantics<parallel>, #tpu.dimension_semantics<parallel>], iteration_bounds = array<i64: 2, 1>, scalar_prefetch = 0 : i64, scratch_operands = 0 : i64, tpu.core_type = #tpu.core_type<tc>, window_params = [{transform_indices = @transform_0, window_bounds = array<i64: 1, 24, 32>}, {transform_indices = @transform_1, window_bounds = array<i64: 1, 8, 32>}]} {
    %c0 = arith.constant 0 : index
    %c0_0 = arith.constant 0 : index
    %c0_1 = arith.constant 0 : index
    %0 = tpu.strided_load %arg2[%c0, %c0_0, %c0_1] {strides = array<i32: 1, 3, 1>} : memref<1x24x32xf32, #tpu.memory_space<vmem>>, vector<1x8x32xf32>
    %1 = vector.shape_cast %0 : vector<1x8x32xf32> to vector<8x32xf32>
    %c0_2 = arith.constant 0 : index
    %c0_3 = arith.constant 0 : index
    %c0_4 = arith.constant 0 : index
    %2 = vector.load %arg3[%c0_2, %c0_3, %c0_4] : memref<1x8x32xf32, #tpu.memory_space<vmem>>, vector<1x8x32xf32>
    %3 = vector.shape_cast %2 : vector<1x8x32xf32> to vector<8x32xf32>
    %4 = vector.shape_cast %1 : vector<8x32xf32> to vector<1x8x32xf32>
    tpu.vector_store %arg3[%c0_2, %c0_3, %c0_4], %4 {strides = array<i32>} : memref<1x8x32xf32, #tpu.memory_space<vmem>>, vector<1x8x32xf32>,
    return
  }
  func.func @transform_0(%arg0: i32, %arg1: i32) -> (i32, i32, i32) {
    %c0_i32 = arith.constant 0 : i32
    %c0_i32_0 = arith.constant 0 : i32
    return %arg0, %arg1, %c0_i32 : i32, i32, i32
  }
  func.func @transform_1(%arg0: i32, %arg1: i32) -> (i32, i32, i32) {
    %c0_i32 = arith.constant 0 : i32
    %c0_i32_0 = arith.constant 0 : i32
    return %arg0, %arg1, %c0_i32 : i32, i32, i32
  }
}

</mosaic_0001>

<llo_original>
// kernel: tpu_custom_call.1
$region0: #{tpu_custom_call.1}
  #allocation0 [shape = 'u32[]', space=smem, size = 0x4, offset = 0x4, fixed_abs, tag = 'smem constant byte address 0x4 - core index']
  #allocation1 [shape = 'u32[144,128]{1,0:T(1,128)}', space=vmem, size = 0x12000, scoped, tag = 'internal scratch']
  %s0 = inlined_call_operand.hbm [shape: f32[2,16,32], index: 0, kind: input, shape index: {}]
  %s1 = inlined_call_operand.vmem [shape: f32[2,6,32], index: 1, kind: output, shape index: {}]
  %s2 = sld [smem:[#allocation0]]
  $region41: #{tpu_custom_call.1} parent=0
    _
  %s4 = ssub.s32 1, %s2
  %s5 = scalar_select 0, %s4, %s2
  $region1: #{tpu_custom_call.1} parent=0
    #allocation2 [shape = 'u8[24576]{0}', space=vmem, size = 0x6000, scoped, tag = 'input window, operand 0']
    #allocation3 [shape = 's32[2]{0}', space=sflag, size = 0x8, scoped, tag = 'scoped memory for tpu_custom_call.1']
    %6 = vsyncpa [#allocation3], 0
    %s7 = scalar_lea.sflag [#allocation3], 1
    %8 = vsyncpa %s7, 0
    loop: start=0, step=1, limit=4
    $region2: #{tpu_custom_call.1} parent=1 // loop_pre_header
      _
    $region3: #{tpu_custom_call.1} parent=1 // loop_header
      %s10 = sphi 0, %s14
      %p11 = scmp.ge.s32.totalorder %s10, 4
      %s17 = sphi 0, %s29
      %s18 = sphi 0, %s25
      %s19 = sphi 0, %s17
      %s20 = sphi 0, %s18
      %s21 = sphi 0, %s19
      %s22 = sphi 0, %s20
      %s34 = sphi 0, %s36
      %s37 = sphi 0, %s34
      %s38 = sphi 0, %s37
      %s54 = sphi 0, %s38
      %s62 = sphi 0, %s64
      %s65 = sphi 0, %s62
      %s66 = sphi 0, %s65
      %s82 = sphi 0, %s66
    $region4: #{tpu_custom_call.1} parent=1 // loop_header_branch
      %13 = sbr.rel (%p11) target = $region8
    $region5: #{tpu_custom_call.1} parent=1 // loop_body
      %s15 = ssub.s32 %s10, 1
      %s16 = ssub.s32 %s10, 2
      %s23 = sadd.s32 1, %s18
      %p24 = scmp.ge.s32.totalorder %s23, 1
      %s25 = scalar_select %p24, 0, %s23
      %s26 = sadd.s32 1, %s17
      %s27 = scalar_select %p24, %s26, %s17
      %p28 = scmp.ge.s32.totalorder %s27, 2
      %s29 = scalar_select %p28, 0, %s27
      %s30 = ssub.s32 %s17, %s29
      %s31 = ssub.s32 %s18, %s25
      %s32 = sor.u32 %s30, %s31
      %p33 = scmp.eq.s32.totalorder %s32, 0
      %s35 = sadd.s32 %s34, 1
      %s36 = scalar_select %p33, %s34, %s35
      %p39 = pneg %p33
      %p40 = scmp.eq.s32.totalorder %s10, 1
      %p41 = por %p39, %p40
      %p42 = scmp.ne.s32.totalorder %s34, %s37
      %p43 = scmp.eq.s32.totalorder %s10, 0
      %p44 = por %p42, %p43
      %p45 = scmp.ne.s32.totalorder %s34, %s37
      %p46 = scmp.eq.s32.totalorder %s15, 1
      %p47 = por %p45, %p46
      %p48 = scmp.ne.s32.totalorder %s37, %s38
      %p49 = scmp.eq.s32.totalorder %s15, 0
      %p50 = por %p48, %p49
      %p51 = scmp.ne.s32.totalorder %s37, %s38
      %p52 = scmp.eq.s32.totalorder %s16, 1
      %p53 = por %p51, %p52
      %p55 = scmp.ne.s32.totalorder %s38, %s54
      %p56 = scmp.eq.s32.totalorder %s16, 0
      %p57 = por %p55, %p56
      %s58 = ssub.s32 %s17, %s29
      %s59 = ssub.s32 %s18, %s25
      %s60 = sor.u32 %s58, %s59
      %p61 = scmp.eq.s32.totalorder %s60, 0
      %s63 = sadd.s32 %s62, 1
      %s64 = scalar_select %p61, %s62, %s63
      %p67 = pneg %p61
      %p68 = scmp.eq.s32.totalorder %s10, 1
      %p69 = por %p67, %p68
      %p70 = scmp.ne.s32.totalorder %s62, %s65
      %p71 = scmp.eq.s32.totalorder %s10, 0
      %p72 = por %p70, %p71
      %p73 = scmp.ne.s32.totalorder %s62, %s65
      %p74 = scmp.eq.s32.totalorder %s15, 1
      %p75 = por %p73, %p74
      %p76 = scmp.ne.s32.totalorder %s65, %s66
      %p77 = scmp.eq.s32.totalorder %s15, 0
      %p78 = por %p76, %p77
      %p79 = scmp.ne.s32.totalorder %s65, %s66
      %p80 = scmp.eq.s32.totalorder %s16, 1
      %p81 = por %p79, %p80
      %p83 = scmp.ne.s32.totalorder %s66, %s82
      %p84 = scmp.eq.s32.totalorder %s16, 0
      %p85 = por %p83, %p84
      %p86 = scmp.le.s32.totalorder 1, %s10
      %p87 = scmp.lt.s32.totalorder %s10, 3
      %p88 = pnand %p86, %p87
      %p89 = pneg %p88
      // Predicated region
      $region9: #{tpu_custom_call.1} parent=5 // pred_check
        _
      $region10: #{tpu_custom_call.1} parent=5 // pred_check_branch
        %91 = sbr.rel (%p88) target = $region12
      $region11: #{tpu_custom_call.1} parent=5 // pred_region
        %s92 = ssub.s32 %s10, 1
      $region12: #{tpu_custom_call.1} parent=5 // pred_fallthru
        _
      %p93 = scmp.lt.s32.totalorder %s10, 2
      // Predicated region
      $region13: #{tpu_custom_call.1} parent=5 // pred_check
        %p94 = pneg %p93
      $region14: #{tpu_custom_call.1} parent=5 // pred_check_branch
        %96 = sbr.rel (%p94) target = $region16
      $region15: #{tpu_custom_call.1} parent=5 // pred_region
        // Predicated region
        $region17: #{tpu_custom_call.1} parent=15 // pred_check
          %p97 = pneg %p44
        $region18: #{tpu_custom_call.1} parent=15 // pred_check_branch
          %99 = sbr.rel (%p97) target = $region20
        $region19: #{tpu_custom_call.1} parent=15 // pred_region
          %s100 = sand.u32 %s34, 1
          %s101 = scalar_lea.sflag [#allocation3], %s100
          %s102 = sand.u32 %s34, 1
          %s103 = smul.addr %s102, 24
          %s104 = scalar_lea.vmem [#allocation2], %s103
          %s105 = smul.u32 3, %s18
          %s106 = ssub.s32 2, %s105
          %s107 = smul.u32 128, %s106
          %s109 = ssub.s32 384, %s107
          %110 = vsyncadd %s101, %s109
          %p111 = scmp.ne.s32.totalorder 0, %s107
          %s112 = smul.addr %s17, 2
          %s113 = sadd.s32 %s105, %s112
          %s114 = smul.addr %s113, 128
          %s115 = scalar_lea.hbm %s0, %s114
          %s116 = smul.u32 8, %s106
          %s117 = sshll.u32 %s104, 4
          %s118 = int_to_ptr.vmem [resolvable:$true] %s117
          %s119 = sshll.u32 %s116, 4
          %123 = dma.hbm_to_vmem [thread:$0]  (%p111), %s115, %s119, %s118, %s101, 128, 128, 8
        $region20: #{tpu_custom_call.1} parent=15 // pred_fallthru
          _
      $region16: #{tpu_custom_call.1} parent=5 // pred_fallthru
        _
      %p124 = scmp.le.s32.totalorder 1, %s10
      %p125 = scmp.lt.s32.totalorder %s10, 3
      %p126 = pnand %p124, %p125
      %p127 = pneg %p126
      // Predicated region
      $region21: #{tpu_custom_call.1} parent=5 // pred_check
        _
      $region22: #{tpu_custom_call.1} parent=5 // pred_check_branch
        %129 = sbr.rel (%p126) target = $region24
      $region23: #{tpu_custom_call.1} parent=5 // pred_region
        %s130 = ssub.s32 %s10, 1
        %s131 = sand.u32 %s37, 1
        %s132 = scalar_lea.sflag [#allocation3], %s131
        %s133 = sand.u32 %s37, 1
        %s134 = smul.addr %s133, 24
        %s135 = scalar_lea.vmem [#allocation2], %s134
        // Predicated region
        $region25: #{tpu_custom_call.1} parent=23 // pred_check
          %p136 = pneg %p50
        $region26: #{tpu_custom_call.1} parent=23 // pred_check_branch
          %138 = sbr.rel (%p136) target = $region28
        $region27: #{tpu_custom_call.1} parent=23 // pred_region
          %139 = dma.done %s132, 384
        $region28: #{tpu_custom_call.1} parent=23 // pred_fallthru
          _
        %s140 = sand.u32 %s37, 1
        %s141 = scalar_lea.sflag [#allocation3], %s140
        %s142 = sand.u32 %s37, 1
        %s143 = smul.addr %s142, 24
        %s144 = scalar_lea.vmem [#allocation2], %s143
        %p145 = pneg %p50
        %p146 = pneg %p47
        %p147 = pneg %p78
        %p148 = pneg %p75
        %p149 = scmp.lt.s32.totalorder %s19, 1
        %s150 = scalar_select %p149, %s19, 1
        %p151 = scmp.lt.s32.totalorder %s20, 0
        %s152 = scalar_select %p151, %s20, 0
        %s153 = sadd.s32 %s152, %s150
        %s154 = smul.addr %s153, 8
        %s155 = scalar_lea.vmem %s1, %s154
        %s156 = smul.u32 3, %s20
        %s157 = ssub.s32 2, %s156
        %s158 = smul.u32 128, %s157
        %p159 = scmp.lt.s32.totalorder %s19, 1
        %s160 = scalar_select %p159, %s19, 1
        %p161 = scmp.lt.s32.totalorder %s20, 0
        %s162 = scalar_select %p161, %s20, 0
        %s163 = sadd.s32 %s162, %s160
        %s164 = smul.addr %s163, 8
        %s165 = scalar_lea.vmem %s1, %s164
        %v166 = vld [vmem:[%s135] ss:$3 sm:$0xff]
        %vm167 = vcmask 261120
        %168 = vst.msk [vmem:[%s165] sm:$0xff] %vm167, %v166
        %p169 = scmp.lt.s32.totalorder %s19, 1
        %s170 = scalar_select %p169, %s19, 1
        %p171 = scmp.lt.s32.totalorder %s20, 0
        %s172 = scalar_select %p171, %s20, 0
        %s173 = sadd.s32 %s172, %s170
        %s174 = smul.addr %s173, 8
        %s175 = scalar_lea.vmem %s1, %s174
        // Predicated region
        $region29: #{tpu_custom_call.1} parent=23 // pred_check
          %p176 = pneg %p75
        $region30: #{tpu_custom_call.1} parent=23 // pred_check_branch
          %178 = sbr.rel (%p176) target = $region32
        $region31: #{tpu_custom_call.1} parent=23 // pred_region
          _
        $region32: #{tpu_custom_call.1} parent=23 // pred_fallthru
          _
      $region24: #{tpu_custom_call.1} parent=5 // pred_fallthru
        _
      %p179 = scmp.le.s32.totalorder 2, %s10
      // Predicated region
      $region33: #{tpu_custom_call.1} parent=5 // pred_check
        %p180 = pneg %p179
      $region34: #{tpu_custom_call.1} parent=5 // pred_check_branch
        %182 = sbr.rel (%p180) target = $region36
      $region35: #{tpu_custom_call.1} parent=5 // pred_region
        %s183 = ssub.s32 %s10, 2
        // Predicated region
        $region37: #{tpu_custom_call.1} parent=35 // pred_check
          %p184 = pneg %p81
        $region38: #{tpu_custom_call.1} parent=35 // pred_check_branch
          %186 = sbr.rel (%p184) target = $region40
        $region39: #{tpu_custom_call.1} parent=35 // pred_region
          %p187 = scmp.lt.s32.totalorder %s21, 1
          %s188 = scalar_select %p187, %s21, 1
          %p189 = scmp.lt.s32.totalorder %s22, 0
          %s190 = scalar_select %p189, %s22, 0
          %s191 = sadd.s32 %s190, %s188
          %s192 = smul.addr %s191, 8
          %s193 = scalar_lea.vmem %s1, %s192
        $region40: #{tpu_custom_call.1} parent=35 // pred_fallthru
          _
      $region36: #{tpu_custom_call.1} parent=5 // pred_fallthru
        _
    $region6: #{tpu_custom_call.1} parent=1 // loop_footer
      %s14 = sadd.s32 1, %s10
    $region7: #{tpu_custom_call.1} parent=1 // loop_footer_branch
      %9 = sbr.rel target = $region3
    $region8: #{tpu_custom_call.1} parent=1 // loop_exit
      _
    %194 = vsyncpa [#allocation3], 1
    %s195 = scalar_lea.sflag [#allocation3], 1
    %196 = vsyncpa %s195, 1

</llo_original>
